<compile_context>
chip_gen: v6e
topology: v6e:2x2x1
jax: 0.10.0
libtpu: 0.0.40
codegen_flags: <defaults>
</compile_context>

<pallas_src>
import jax
import jax.numpy as jnp
from jax.experimental import pallas as pl
from jax.experimental.pallas import tpu as pltpu


def _round_up(x: int, m: int) -> int:
    return (x + m - 1) // m * m


def _pad_and_tile(dim: int, align: int, max_tile: int):
    """Pad `dim` to a multiple of `align`; tile by `max_tile` if larger."""
    d = _round_up(dim, align)
    if d <= max_tile:
        return d, d            # single full-size block
    d = _round_up(dim, max_tile)
    return d, max_tile


def _linear_kernel(x_ref, w_ref, o_ref, acc_ref):
    """One tile of h = feat2d @ W, f32 accumulation over the K grid axis."""
    k = pl.program_id(2)

    @pl.when(k == 0)
    def _init():
        acc_ref[...] = jnp.zeros_like(acc_ref)

    acc_ref[...] += jnp.dot(x_ref[...], w_ref[...],
                            preferred_element_type=jnp.float32)

    @pl.when(k == pl.num_programs(2) - 1)
    def _store():
        o_ref[...] = acc_ref[...].astype(o_ref.dtype)


def _prop_kernel(adj_ref, h_ref, bias_ref, alpha_ref, out_ref, acc_ref):
    """One (batch, row-tile): out = PReLU(adj @ h + bias); K-tiled accumulate."""
    k = pl.program_id(2)

    @pl.when(k == 0)
    def _init():
        acc_ref[...] = jnp.zeros_like(acc_ref)

    acc_ref[...] += jnp.dot(adj_ref[0], h_ref[0],
                            preferred_element_type=jnp.float32)

    @pl.when(k == pl.num_programs(2) - 1)
    def _epilogue():
        a = alpha_ref[0, 0]                      # SMEM scalar (PReLU slope)
        y = acc_ref[...] + bias_ref[...]         # f32 epilogue
        out_ref[0] = jnp.where(y >= 0.0, y, a * y).astype(out_ref.dtype)


def gcn_forward(feat, adj, weight, bias, alpha):
    """feat: (B, N, F_in), adj: (B, N, N), weight: (F_in, F_out) (nn.Linear
    weight pre-transposed), bias: (F_out,), alpha: scalar PReLU slope."""
    B, N, F_in = feat.shape
    F_out = weight.shape[1]
    out_dtype = feat.dtype

    # ---- padded sizes & tiles (lane dims -> multiples of 128) --------------
    Fi_p, tk_lin = _pad_and_tile(F_in, 128, 512)    # linear contraction dim
    Fo_p, tn_lin = _pad_and_tile(F_out, 128, 512)   # lane-dense output dim
    N_p, t_adj = _pad_and_tile(N, 8, 256)           # adj row / contraction tile
    M = B * N_p
    M_p, tm_lin = _pad_and_tile(M, 8, 512)          # fused row dim of the linear

    # ---- zero-pad once in the wrapper; padding contributes zeros ----------
    feat_p = jnp.pad(feat, ((0, 0), (0, N_p - N), (0, Fi_p - F_in)))
    adj_p = jnp.pad(adj, ((0, 0), (0, N_p - N), (0, N_p - N)))
    w_p = jnp.pad(weight.astype(out_dtype), ((0, Fi_p - F_in), (0, Fo_p - F_out)))
    bias_p = jnp.pad(jnp.asarray(bias, jnp.float32).reshape(1, F_out),
                     ((0, 0), (0, Fo_p - F_out)))
    alpha_s = jnp.asarray(alpha, jnp.float32).reshape(1, 1)

    feat2d = jnp.pad(feat_p.reshape(M, Fi_p), ((0, M_p - M), (0, 0)))

    vmem_cap = 48 * 1024 * 1024   # explicit scoped-VMEM cap; safe on v5e/v6e/v7x

    # ---- stage 1: h = feat @ W as ONE matmul over all batches --------------
    # TODO(synk): when F_in < F_out the other association (adj @ feat first,
    # then @ W) has fewer FLOPs; only the F_out <= F_in ordering is implemented.
    h2d = pl.pallas_call(
        _linear_kernel,
        out_shape=jax.ShapeDtypeStruct((M_p, Fo_p), out_dtype),
        grid_spec=pltpu.PrefetchScalarGridSpec(
            num_scalar_prefetch=0,
            grid=(M_p // tm_lin, Fo_p // tn_lin, Fi_p // tk_lin),
            in_specs=[
                pl.BlockSpec((tm_lin, tk_lin), lambda i, j, k: (i, k)),
                pl.BlockSpec((tk_lin, tn_lin), lambda i, j, k: (k, j)),
            ],
            out_specs=pl.BlockSpec((tm_lin, tn_lin), lambda i, j, k: (i, j)),
            scratch_shapes=[pltpu.VMEM((tm_lin, tn_lin), jnp.float32)],
        ),
        compiler_params=pltpu.CompilerParams(
            dimension_semantics=("parallel", "parallel", "arbitrary"),
            vmem_limit_bytes=vmem_cap),
    )(feat2d, w_p)

    h = h2d[:M].reshape(B, N_p, Fo_p)

    # ---- stage 2: out = PReLU(adj @ h + bias), tiled over (B, rows, k) -----
    out_p = pl.pallas_call(
        _prop_kernel,
        out_shape=jax.ShapeDtypeStruct((B, N_p, Fo_p), out_dtype),
        grid_spec=pltpu.PrefetchScalarGridSpec(
            num_scalar_prefetch=0,
            grid=(B, N_p // t_adj, N_p // t_adj),
            in_specs=[
                pl.BlockSpec((1, t_adj, t_adj), lambda b, i, k: (b, i, k)),
                pl.BlockSpec((1, t_adj, Fo_p), lambda b, i, k: (b, k, 0)),
                pl.BlockSpec((1, Fo_p), lambda b, i, k: (0, 0)),
                pl.BlockSpec(memory_space=pltpu.MemorySpace.SMEM),
            ],
            out_specs=pl.BlockSpec((1, t_adj, Fo_p), lambda b, i, k: (b, i, 0)),
            scratch_shapes=[pltpu.VMEM((t_adj, Fo_p), jnp.float32)],
        ),
        compiler_params=pltpu.CompilerParams(
            dimension_semantics=("parallel", "parallel", "arbitrary"),
            vmem_limit_bytes=vmem_cap),
    )(adj_p, h, bias_p, alpha_s)

    return out_p[:, :N, :F_out]


if __name__ == "__main__":
    # Small shapes consistent with the module's forward.
    B, N, F_in, F_out = 2, 16, 32, 32

    key = jax.random.PRNGKey(0)
    k_feat, k_adj, k_w = jax.random.split(key, 3)

    feat = jax.random.normal(k_feat, (B, N, F_in), dtype=jnp.float32)

    # Symmetric row-normalized dense adjacency (typical GCN input).
    a_raw = jax.random.uniform(k_adj, (B, N, N), dtype=jnp.float32)
    a_sym = 0.5 * (a_raw + jnp.swapaxes(a_raw, 1, 2)) + jnp.eye(N)[None]
    adj = a_sym / jnp.sum(a_sym, axis=-1, keepdims=True)

    # Parameters matching PyTorch __init__ semantics:
    # xavier_uniform_ on fc.weight (shape (out_ft, in_ft)); stored transposed.
    bound = (6.0 / (F_in + F_out)) ** 0.5
    weight = jax.random.uniform(k_w, (F_in, F_out), minval=-bound, maxval=bound,
                                dtype=jnp.float32)
    bias = jnp.zeros((F_out,), dtype=jnp.float32)   # bias.data.fill_(0.0)
    alpha = jnp.float32(0.25)                       # nn.PReLU default init

    out = gcn_forward(feat, adj, weight, bias, alpha)
    out = jax.block_until_ready(out)

    # Pure-JAX reference check.
    h_ref = feat @ weight
    o_ref = jnp.einsum("bij,bjf->bif", adj, h_ref) + bias
    o_ref = jnp.where(o_ref >= 0, o_ref, alpha * o_ref)
    assert out.shape == (B, N, F_out)
    assert jnp.allclose(out, o_ref, atol=1e-5, rtol=1e-5), (
        float(jnp.max(jnp.abs(out - o_ref))))

    # TODO(synk): sparse=True path (torch.spmm) not implemented; dense bmm only.
    print("KERNEL_OK")
</pallas_src>

<mosaic_0001>
module attributes {stable_mosaic.version = 11 : i64} {
  func.func @_linear_kernel(%arg0: i32, %arg1: i32, %arg2: i32, %arg3: memref<32x128xf32, #tpu.memory_space<vmem>>, %arg4: memref<128x128xf32, #tpu.memory_space<vmem>>, %arg5: memref<32x128xf32, #tpu.memory_space<vmem>>, %arg6: memref<32x128xf32, #tpu.memory_space<vmem>>) attributes {dimension_semantics = [#tpu.dimension_semantics<parallel>, #tpu.dimension_semantics<parallel>, #tpu.dimension_semantics<arbitrary>], iteration_bounds = array<i64: 1, 1, 1>, scalar_prefetch = 0 : i64, scratch_operands = 1 : i64, tpu.core_type = #tpu.core_type<tc>, window_params = [{transform_indices = @transform_0, window_bounds = array<i64: 32, 128>}, {transform_indices = @transform_1, window_bounds = array<i64: 128, 128>}, {transform_indices = @transform_2, window_bounds = array<i64: 32, 128>}]} {
    %c0_i32 = arith.constant 0 : i32
    %0 = arith.cmpi eq, %arg2, %c0_i32 : i32
    %1 = arith.extui %0 : i1 to i32
    %c0_i32_0 = arith.constant 0 : i32
    %2 = arith.cmpi ne, %1, %c0_i32_0 : i32
    scf.if %2 {
      %cst_10 = arith.constant 0.000000e+00 : f32
      %12 = vector.broadcast %cst_10 : f32 to vector<32x128xf32>
      %c0_11 = arith.constant 0 : index
      %c0_12 = arith.constant 0 : index
      %13 = vector.load %arg6[%c0_11, %c0_12] : memref<32x128xf32, #tpu.memory_space<vmem>>, vector<32x128xf32>
      tpu.vector_store %arg6[%c0_11, %c0_12], %12 {strides = array<i32>} : memref<32x128xf32, #tpu.memory_space<vmem>>, vector<32x128xf32>,
    } else {
    }
    %c0 = arith.constant 0 : index
    %c0_1 = arith.constant 0 : index
    %3 = vector.load %arg6[%c0, %c0_1] : memref<32x128xf32, #tpu.memory_space<vmem>>, vector<32x128xf32>
    %c0_2 = arith.constant 0 : index
    %c0_3 = arith.constant 0 : index
    %4 = vector.load %arg3[%c0_2, %c0_3] : memref<32x128xf32, #tpu.memory_space<vmem>>, vector<32x128xf32>
    %c0_4 = arith.constant 0 : index
    %c0_5 = arith.constant 0 : index
    %5 = vector.load %arg4[%c0_4, %c0_5] : memref<128x128xf32, #tpu.memory_space<vmem>>, vector<128x128xf32>
    %cst = arith.constant dense<0.000000e+00> : vector<32x128xf32>
    %6 = tpu.matmul %4, %5, %cst {dimension_numbers = #tpu.dot_dimension_numbers<[1], [0], [0], [1], [0, 0, 1, 1], [], []>} : vector<32x128xf32>, vector<128x128xf32>, vector<32x128xf32> -> vector<32x128xf32>
    %7 = arith.addf %3, %6 : vector<32x128xf32>
    %c0_6 = arith.constant 0 : index
    %c0_7 = arith.constant 0 : index
    %8 = vector.load %arg6[%c0_6, %c0_7] : memref<32x128xf32, #tpu.memory_space<vmem>>, vector<32x128xf32>
    tpu.vector_store %arg6[%c0_6, %c0_7], %7 {strides = array<i32>} : memref<32x128xf32, #tpu.memory_space<vmem>>, vector<32x128xf32>,
    %c0_i32_8 = arith.constant 0 : i32
    %9 = arith.cmpi eq, %arg2, %c0_i32_8 : i32
    %10 = arith.extui %9 : i1 to i32
    %c0_i32_9 = arith.constant 0 : i32
    %11 = arith.cmpi ne, %10, %c0_i32_9 : i32
    scf.if %11 {
      %c0_10 = arith.constant 0 : index
      %c0_11 = arith.constant 0 : index
      %12 = vector.load %arg6[%c0_10, %c0_11] : memref<32x128xf32, #tpu.memory_space<vmem>>, vector<32x128xf32>
      %c0_12 = arith.constant 0 : index
      %c0_13 = arith.constant 0 : index
      %13 = vector.load %arg5[%c0_12, %c0_13] : memref<32x128xf32, #tpu.memory_space<vmem>>, vector<32x128xf32>
      tpu.vector_store %arg5[%c0_12, %c0_13], %12 {strides = array<i32>} : memref<32x128xf32, #tpu.memory_space<vmem>>, vector<32x128xf32>,
    } else {
    }
    return
  }
  func.func @transform_0(%arg0: i32, %arg1: i32, %arg2: i32) -> (i32, i32) {
    %c0_i32 = arith.constant 0 : i32
    return %arg0, %arg2 : i32, i32
  }
  func.func @transform_1(%arg0: i32, %arg1: i32, %arg2: i32) -> (i32, i32) {
    %c0_i32 = arith.constant 0 : i32
    return %arg2, %arg1 : i32, i32
  }
  func.func @transform_2(%arg0: i32, %arg1: i32, %arg2: i32) -> (i32, i32) {
    %c0_i32 = arith.constant 0 : i32
    return %arg0, %arg1 : i32, i32
  }
}

</mosaic_0001>

<llo_original>
// kernel: tpu_custom_call.1
$region0: #{tpu_custom_call.1}
  #allocation0 [shape = 'u32[]', space=smem, size = 0x4, offset = 0x4, fixed_abs, tag = 'smem constant byte address 0x4 - core index']
  #allocation1 [shape = 'u32[144,128]{1,0:T(1,128)}', space=vmem, size = 0x12000, scoped, tag = 'internal scratch']
  #allocation2 [shape = 'f32[32,128]{1,0:T(8,128)}', space=vmem, size = 0x4000, scoped, tag = 'scratch operand']
  %s0 = inlined_call_operand.hbm [shape: f32[32,128], index: 0, kind: input, shape index: {}]
  %s1 = inlined_call_operand.hbm [shape: f32[128,128], index: 1, kind: input, shape index: {}]
  %s2 = inlined_call_operand.hbm [shape: f32[32,128], index: 2, kind: output, shape index: {}]
  %s3 = sld [smem:[#allocation0]]
  $region34: #{tpu_custom_call.1} parent=0
    _
  %s5 = ssub.s32 1, %s3
  %s6 = scalar_select 0, %s5, %s3
  $region1: #{tpu_custom_call.1} parent=0
    #allocation3 [shape = 'u8[16384]{0}', space=vmem, size = 0x4000, scoped, tag = 'input window, operand 0, single buffered']
    #allocation4 [shape = 's32[1]{0}', space=sflag, size = 0x4, scoped, tag = 'scoped memory for tpu_custom_call.1']
    #allocation5 [shape = 's32[1]{0}', space=sflag, size = 0x4, scoped, tag = 'scoped memory for tpu_custom_call.1']
    #allocation6 [shape = 'u8[65536]{0}', space=vmem, size = 0x10000, scoped, tag = 'input window, operand 1, single buffered']
    #allocation7 [shape = 's32[1]{0}', space=sflag, size = 0x4, scoped, tag = 'scoped memory for tpu_custom_call.1']
    #allocation8 [shape = 'u8[16384]{0}', space=vmem, size = 0x4000, scoped, tag = 'output window, operand 0, single buffered']
    %7 = vsyncpa [#allocation4], 0
    %8 = vsyncpa [#allocation7], 0
    %9 = vsyncpa [#allocation5], 0
    // Predicated region
    $region2: #{tpu_custom_call.1} parent=1 // pred_check
      _
    $region3: #{tpu_custom_call.1} parent=1 // pred_check_branch
      %11 = sbr.rel (0) target = $region5
    $region4: #{tpu_custom_call.1} parent=1 // pred_region
      %s13 = ssub.s32 512, 512
      %14 = vsyncadd [#allocation4], %s13
      %s15 = sshll.u32 [#allocation3], 4
      %s16 = int_to_ptr.vmem [resolvable:$true] %s15
      %21 = dma.hbm_to_vmem [thread:$0]  %s0, 512, %s16, [#allocation4], 128, 128, 8
    $region5: #{tpu_custom_call.1} parent=1 // pred_fallthru
      _
    // Predicated region
    $region6: #{tpu_custom_call.1} parent=1 // pred_check
      _
    $region7: #{tpu_custom_call.1} parent=1 // pred_check_branch
      %23 = sbr.rel (0) target = $region9
    $region8: #{tpu_custom_call.1} parent=1 // pred_region
      %s25 = ssub.s32 2048, 2048
      %26 = vsyncadd [#allocation7], %s25
      %s27 = sshll.u32 [#allocation6], 4
      %s28 = int_to_ptr.vmem [resolvable:$true] %s27
      %33 = dma.hbm_to_vmem [thread:$0]  %s1, 2048, %s28, [#allocation7], 128, 128, 8
    $region9: #{tpu_custom_call.1} parent=1 // pred_fallthru
      _
    // Predicated region
    $region10: #{tpu_custom_call.1} parent=1 // pred_check
      _
    $region11: #{tpu_custom_call.1} parent=1 // pred_check_branch
      %35 = sbr.rel (0) target = $region13
    $region12: #{tpu_custom_call.1} parent=1 // pred_region
      %36 = dma.done [#allocation4], 512
    $region13: #{tpu_custom_call.1} parent=1 // pred_fallthru
      _
    // Predicated region
    $region14: #{tpu_custom_call.1} parent=1 // pred_check
      _
    $region15: #{tpu_custom_call.1} parent=1 // pred_check_branch
      %38 = sbr.rel (0) target = $region17
    $region16: #{tpu_custom_call.1} parent=1 // pred_region
      %39 = dma.done [#allocation7], 2048
    $region17: #{tpu_custom_call.1} parent=1 // pred_fallthru
      _
    %p40 = scmp.eq.s32.totalorder 0, 0
    // Predicated region
    $region18: #{tpu_custom_call.1} parent=1 // pred_check
      %p41 = pneg %p40
    $region19: #{tpu_custom_call.1} parent=1 // pred_check_branch
      %43 = sbr.rel (%p41) target = $region21
    $region20: #{tpu_custom_call.1} parent=1 // pred_region
      %44 = vst [vmem:[#allocation2] sm:$0xff] 0.0
      %45 = vst [vmem:[#allocation2 + $0x8] sm:$0xff] 0.0
      %46 = vst [vmem:[#allocation2 + $0x10] sm:$0xff] 0.0
      %47 = vst [vmem:[#allocation2 + $0x18] sm:$0xff] 0.0
    $region21: #{tpu_custom_call.1} parent=1 // pred_fallthru
      _
    %v48 = vld [vmem:[#allocation2] sm:$0xff]
    %v49 = vld [vmem:[#allocation2 + $0x8] sm:$0xff]
    %v50 = vld [vmem:[#allocation2 + $0x10] sm:$0xff]
    %v51 = vld [vmem:[#allocation2 + $0x18] sm:$0xff]
    %v52 = vld [vmem:[#allocation3] sm:$0xff]
    %v53 = vld [vmem:[#allocation3 + $0x8] sm:$0xff]
    %v54 = vld [vmem:[#allocation3 + $0x10] sm:$0xff]
    %v55 = vld [vmem:[#allocation3 + $0x18] sm:$0xff]
    %v56 = vld [vmem:[#allocation6] sm:$0xff]
    %v57 = vld [vmem:[#allocation6 + $0x8] sm:$0xff]
    %v58 = vld [vmem:[#allocation6 + $0x10] sm:$0xff]
    %v59 = vld [vmem:[#allocation6 + $0x18] sm:$0xff]
    %v60 = vld [vmem:[#allocation6 + $0x20] sm:$0xff]
    %v61 = vld [vmem:[#allocation6 + $0x28] sm:$0xff]
    %v62 = vld [vmem:[#allocation6 + $0x30] sm:$0xff]
    %v63 = vld [vmem:[#allocation6 + $0x38] sm:$0xff]
    %v64 = vld [vmem:[#allocation6 + $0x40] sm:$0xff]
    %v65 = vld [vmem:[#allocation6 + $0x48] sm:$0xff]
    %v66 = vld [vmem:[#allocation6 + $0x50] sm:$0xff]
    %v67 = vld [vmem:[#allocation6 + $0x58] sm:$0xff]
    %v68 = vld [vmem:[#allocation6 + $0x60] sm:$0xff]
    %v69 = vld [vmem:[#allocation6 + $0x68] sm:$0xff]
    %v70 = vld [vmem:[#allocation6 + $0x70] sm:$0xff]
    %v71 = vld [vmem:[#allocation6 + $0x78] sm:$0xff]
    %72 = vmatprep.subr.mxu0 0.0
    %73 = vmatpush1.msra.mxu0 %v71
    %74 = vmatprep.subr.mxu0 0.0
    %75 = vmatpush1.msra.mxu0 %v70
    %76 = vmatprep.subr.mxu0 0.0
    %77 = vmatpush1.msra.mxu0 %v69
    %78 = vmatprep.subr.mxu0 0.0
    %79 = vmatpush1.msra.mxu0 %v68
    %80 = vmatprep.subr.mxu0 0.0
    %81 = vmatpush1.msra.mxu0 %v67
    %82 = vmatprep.subr.mxu0 0.0
    %83 = vmatpush1.msra.mxu0 %v66
    %84 = vmatprep.subr.mxu0 0.0
    %85 = vmatpush1.msra.mxu0 %v65
    %86 = vmatprep.subr.mxu0 0.0
    %87 = vmatpush1.msra.mxu0 %v64
    %88 = vmatprep.subr.mxu0 0.0
    %89 = vmatpush1.msra.mxu0 %v63
    %90 = vmatprep.subr.mxu0 0.0
    %91 = vmatpush1.msra.mxu0 %v62
    %92 = vmatprep.subr.mxu0 0.0
    %93 = vmatpush1.msra.mxu0 %v61
    %94 = vmatprep.subr.mxu0 0.0
    %95 = vmatpush1.msra.mxu0 %v60
    %96 = vmatprep.subr.mxu0 0.0
    %97 = vmatpush1.msra.mxu0 %v59
    %98 = vmatprep.subr.mxu0 0.0
    %99 = vmatpush1.msra.mxu0 %v58
    %100 = vmatprep.subr.mxu0 0.0
    %101 = vmatpush1.msra.mxu0 %v57
    %102 = vmatprep.subr.mxu0 0.0
    %103 = vmatpush1.msra.mxu0 %v56
    %104 = vmatprep.subr.mxu0 0.0
    %105 = vmatpush2.msra.mxu0 0.0
    %106 = vmatprep.subr.mxu0 0.0
    %107 = vmatpush2.msra.mxu0 0.0
    %108 = vmatprep.subr.mxu0 0.0
    %109 = vmatpush2.msra.mxu0 0.0
    %110 = vmatprep.subr.mxu0 0.0
    %111 = vmatpush2.msra.mxu0 0.0
    %112 = vmatprep.subr.mxu0 0.0
    %113 = vmatpush2.msra.mxu0 0.0
    %114 = vmatprep.subr.mxu0 0.0
    %115 = vmatpush2.msra.mxu0 0.0
    %116 = vmatprep.subr.mxu0 0.0
    %117 = vmatpush2.msra.mxu0 0.0
    %118 = vmatprep.subr.mxu0 0.0
    %119 = vmatpush2.msra.mxu0 0.0
    %120 = vmatprep.subr.mxu0 0.0
    %121 = vmatpush2.msra.mxu0 0.0
    %122 = vmatprep.subr.mxu0 0.0
    %123 = vmatpush2.msra.mxu0 0.0
    %124 = vmatprep.subr.mxu0 0.0
    %125 = vmatpush2.msra.mxu0 0.0
    %126 = vmatprep.subr.mxu0 0.0
    %127 = vmatpush2.msra.mxu0 0.0
    %128 = vmatprep.subr.mxu0 0.0
    %129 = vmatpush2.msra.mxu0 0.0
    %130 = vmatprep.subr.mxu0 0.0
    %131 = vmatpush2.msra.mxu0 0.0
    %132 = vmatprep.subr.mxu0 0.0
    %133 = vmatpush2.msra.mxu0 0.0
    %134 = vmatprep.subr.mxu0 0.0
    %135 = vmatpush2.msra.mxu0 0.0
    %136 = vmatprep.mubr.f32.mxu0 0.0
    %137 = vmatmul.mubr.f32.gmra.mxu0 %v52
    %v138 = vpop.f32.mrf.mxu0
    %v139 = vadd.f32 0.0, %v138
    %v140 = vpop.f32.mrf.mxu0
    %141 = vmatprep.mubr.f32.mxu0 0.0
    %142 = vmatmul.mubr.f32.gmra.mxu0 %v53
    %v143 = vpop.f32.mrf.mxu0
    %v144 = vadd.f32 0.0, %v143
    %v145 = vpop.f32.mrf.mxu0
    %146 = vmatprep.mubr.f32.mxu0 0.0
    %147 = vmatmul.mubr.f32.gmra.mxu0 %v54
    %v148 = vpop.f32.mrf.mxu0
    %v149 = vadd.f32 0.0, %v148
    %v150 = vpop.f32.mrf.mxu0
    %151 = vmatprep.mubr.f32.mxu0 0.0
    %152 = vmatmul.mubr.f32.gmra.mxu0 %v55
    %v153 = vpop.f32.mrf.mxu0
    %v154 = vadd.f32 0.0, %v153
    %v155 = vpop.f32.mrf.mxu0
    %156 = vdwg.mxu0
    %v157 = vadd.f32 %v48, %v139
    %v158 = vadd.f32 %v49, %v144
    %v159 = vadd.f32 %v50, %v149
    %v160 = vadd.f32 %v51, %v154
    %161 = vst [vmem:[#allocation2] sm:$0xff] %v157
    %162 = vst [vmem:[#allocation2 + $0x8] sm:$0xff] %v158
    %163 = vst [vmem:[#allocation2 + $0x10] sm:$0xff] %v159
    %164 = vst [vmem:[#allocation2 + $0x18] sm:$0xff] %v160
    // Predicated region
    $region22: #{tpu_custom_call.1} parent=1 // pred_check
      %p165 = pneg %p40
    $region23: #{tpu_custom_call.1} parent=1 // pred_check_branch
      %167 = sbr.rel (%p165) target = $region25
    $region24: #{tpu_custom_call.1} parent=1 // pred_region
      %v168 = vld [vmem:[#allocation2] sm:$0xff]
      %v169 = vld [vmem:[#allocation2 + $0x8] sm:$0xff]
      %v170 = vld [vmem:[#allocation2 + $0x10] sm:$0xff]
      %v171 = vld [vmem:[#allocation2 + $0x18] sm:$0xff]
      %172 = vst [vmem:[#allocation8] sm:$0xff] %v168
      %173 = vst [vmem:[#allocation8 + $0x8] sm:$0xff] %v169
      %174 = vst [vmem:[#allocation8 + $0x10] sm:$0xff] %v170
      %175 = vst [vmem:[#allocation8 + $0x18] sm:$0xff] %v171
    $region25: #{tpu_custom_call.1} parent=1 // pred_fallthru
      _
    // Predicated region
    $region26: #{tpu_custom_call.1} parent=1 // pred_check
      _
    $region27: #{tpu_custom_call.1} parent=1 // pred_check_branch
      %177 = sbr.rel (0) target = $region29
    $region28: #{tpu_custom_call.1} parent=1 // pred_region
      %s179 = ssub.s32 512, 512
      %180 = vsyncadd [#allocation5], %s179
      %s181 = sshll.u32 [#allocation8], 4
      %s182 = int_to_ptr.vmem [resolvable:$true] %s181
      %187 = dma.vmem_to_hbm [thread:$0]  %s182, 512, %s2, [#allocation5], 128, 128, 8
    $region29: #{tpu_custom_call.1} parent=1 // pred_fallthru
      _
    // Predicated region
    $region30: #{tpu_custom_call.1} parent=1 // pred_check
      _
    $region31: #{tpu_custom_call.1} parent=1 // pred_check_branch
      %189 = sbr.rel (0) target = $region33
    $region32: #{tpu_custom_call.1} parent=1 // pred_region
      %190 = dma.done [#allocation5], 512
    $region33: #{tpu_custom_call.1} parent=1 // pred_fallthru
      _
    %191 = vsyncpa [#allocation4], 1
    %192 = vsyncpa [#allocation7], 1
    %193 = vsyncpa [#allocation5], 1

</llo_original>
